<compile_context>
chip_gen: v7x
topology: tpu7x:2x2x1
jax: 0.10.0
libtpu: 0.0.40
codegen_flags: <defaults>
</compile_context>

<pallas_src>
import functools

import jax
import jax.numpy as jnp
from jax.experimental import pallas as pl
from jax.experimental.pallas import tpu as pltpu

EPS = 1e-6
_LANES = 128
# Sublane rows per pixel tile.  With the tiny (3, C, 128) accumulator the only
# VMEM pressure is the double-buffered input tiles:
#   2 inputs x 2 buffers x (C=4, 1024, 128) f32 = 8 MiB
# which fits every generation's scoped-VMEM budget (limit raised to 32 MiB).
_MAX_ST = 1024


def _dice_partial_kernel(x_ref, m_ref, o_ref, acc_ref, *,
                         st, j_half, p_split, valid_rows):
    """One (batch, pixel-split, pixel-tile) grid step.

    x_ref, m_ref : (1, C, st, 128)   input tiles (native dtype, cast here)
    o_ref        : (1, 1, 3, C, 128) per-(batch, split) partials
    acc_ref      : (3, C, 128) f32 running partials [inter, sum_p, sum_m]
    """
    pp = pl.program_id(1)
    pj = pl.program_id(2)

    @pl.when(pj == 0)
    def _():
        acc_ref[...] = jnp.zeros_like(acc_ref)

    def accumulate(masked):
        x = x_ref[0].astype(jnp.float32)          # (C, st, 128) logits
        m = m_ref[0].astype(jnp.float32)          # (C, st, 128) mask
        if masked:
            # Ragged last pixel tile: rows >= valid_rows were never DMA'd
            # (unspecified VMEM contents), so mask the logits *before* exp
            # and zero the mask / prob contributions.
            row = jax.lax.broadcasted_iota(jnp.int32, (1, st, _LANES), 1)
            valid = row < valid_rows
            x = jnp.where(valid, x, 0.0)
            m = jnp.where(valid, m, 0.0)
        # Numerically-stable softmax across the class axis (leading axis ->
        # pure VPU/EUP work on lane-dense vregs); one reciprocal + C mults.
        x_max = jnp.max(x, axis=0, keepdims=True)       # (1, st, 128)
        e = jnp.exp(x - x_max)                          # (C, st, 128)
        denom = jnp.sum(e, axis=0, keepdims=True)       # (1, st, 128)
        probs = e * pl.reciprocal(denom)                # exact: keeps 1e-5 tol
        if masked:
            probs = jnp.where(valid, probs, 0.0)
        # Reduce the tile in-registers (one sublane reduce per partial) and
        # accumulate into the tiny scratch -- no multi-MiB VMEM RMW per tile.
        acc_ref[0] += jnp.sum(probs * m, axis=1)        # intersection (C,128)
        acc_ref[1] += jnp.sum(probs, axis=1)            # sum of probabilities
        acc_ref[2] += jnp.sum(m, axis=1)                # sum of mask

    if valid_rows is None:
        accumulate(masked=False)                        # no ragged tile at all
    else:
        is_last = (pp == p_split - 1) & (pj == j_half - 1)

        @pl.when(jnp.logical_not(is_last))
        def _():
            accumulate(masked=False)

        @pl.when(is_last)
        def _():
            accumulate(masked=True)

    @pl.when(pj == j_half - 1)
    def _():
        o_ref[0, 0] = acc_ref[...]                      # (3, C, 128), tiny


def dice_loss_multiclass(output, mask, *, max_st=_MAX_ST):
    """output, mask: (N, C, H, W) -> scalar float32 loss (evaluate=False)."""
    n, c, h, w = output.shape
    hw = h * w

    # Free reshape (H*W contiguous per (n, c) in NCHW) -- no HBM transpose.
    x = output.reshape(n, c, hw)
    m = mask.reshape(n, c, hw)

    s = pl.cdiv(hw, _LANES)
    pad_px = s * _LANES - hw
    if pad_px:
        # Minimal pad to a lane multiple only (never to a tile multiple): the
        # zero-padded pixels get softmax == 1/C per class, which is subtracted
        # analytically from sum_p below, so no in-kernel masking is needed for
        # them and no extra HBM copy happens on lane-aligned inputs.
        x = jnp.pad(x, ((0, 0), (0, 0), (0, pad_px)))
        m = jnp.pad(m, ((0, 0), (0, 0), (0, pad_px)))
    x = x.reshape(n, c, s, _LANES)
    m = m.reshape(n, c, s, _LANES)

    if s <= max_st:
        st = s                     # one tile == full pixel extent
        j_tiles = 1
    else:
        st = max_st                # multiple of 8 -> valid (8,128) tiling
        j_tiles = pl.cdiv(s, st)   # last tile may be partial (no HBM re-pad)
    ragged = j_tiles > 1 and (s % st) != 0
    valid_rows = (s - (j_tiles - 1) * st) if ragged else None

    # 2-way pixel split so both v7x TensorCores get work even at N == 1
    # (no-op on single-core v5e/v6e).  Only used when it divides evenly so no
    # grid step maps to a fully out-of-bounds block.
    p_split = 2 if (j_tiles >= 2 and j_tiles % 2 == 0) else 1
    j_half = j_tiles // p_split

    kernel = functools.partial(_dice_partial_kernel, st=st, j_half=j_half,
                               p_split=p_split, valid_rows=valid_rows)

    partials = pl.pallas_call(
        kernel,
        out_shape=jax.ShapeDtypeStruct((n, p_split, 3, c, _LANES), jnp.float32),
        grid_spec=pltpu.PrefetchScalarGridSpec(
            num_scalar_prefetch=0,
            grid=(n, p_split, j_half),
            in_specs=[
                pl.BlockSpec((1, c, st, _LANES),
                             lambda ni, p, j: (ni, 0, p * j_half + j, 0)),
                pl.BlockSpec((1, c, st, _LANES),
                             lambda ni, p, j: (ni, 0, p * j_half + j, 0)),
            ],
            out_specs=pl.BlockSpec((1, 1, 3, c, _LANES),
                                   lambda ni, p, j: (ni, p, 0, 0, 0)),
            scratch_shapes=[pltpu.VMEM((3, c, _LANES), jnp.float32)],
        ),
        compiler_params=pltpu.CompilerParams(
            dimension_semantics=("parallel", "parallel", "arbitrary"),
            vmem_limit_bytes=32 * 1024 * 1024),
    )(x, m)

    # TODO(synk): if the caller can supply integer labels instead of a dense
    # one-hot mask, build the one-hot in-kernel to cut mask HBM traffic ~C*4x.
    sums = jnp.sum(partials, axis=(0, 1, 4))          # (3, C) float32
    inter, sum_p, sum_m = sums[0], sums[1], sums[2]
    if pad_px:
        sum_p = sum_p - (n * pad_px) / c              # remove 1/C-per-pad-pixel
    t = (2.0 * inter + EPS) / (sum_p + sum_m + EPS)
    # TODO(synk): the '/ 3' divisor is hardcoded in the original PyTorch module
    # even though it sums over all C classes; reproduced verbatim (not '/ C').
    return 1.0 - jnp.sum(t) / 3.0


def _reference(output, mask):
    # Pure-JAX reference mirroring the PyTorch module (evaluate=False).
    probs = jax.nn.softmax(output, axis=1)
    dice = 0.0
    for i in range(output.shape[1]):
        p = probs[:, i].reshape(-1)
        g = mask[:, i].reshape(-1)
        inter = jnp.dot(p, g)
        union = jnp.sum(p) + jnp.sum(g) + EPS
        dice = dice + (2.0 * inter + EPS) / union
    return 1.0 - dice / 3.0


def _make_inputs(key, n, c, h, w):
    k1, k2 = jax.random.split(key)
    logits = jax.random.normal(k1, (n, c, h, w), dtype=jnp.float32)
    labels = jax.random.randint(k2, (n, h, w), 0, c)
    mask = jnp.transpose(jax.nn.one_hot(labels, c, dtype=jnp.float32),
                         (0, 3, 1, 2))                 # (N, C, H, W) one-hot
    return logits, mask


if __name__ == "__main__":
    keys = jax.random.split(jax.random.PRNGKey(0), 3)

    # Main case: (2, 4, 16, 16) -- lane-aligned, single tile.
    logits, mask = _make_inputs(keys[0], 2, 4, 16, 16)
    loss = dice_loss_multiclass(logits, mask)
    jax.block_until_ready(loss)
    ref = _reference(logits, mask)
    assert jnp.allclose(loss, ref, atol=1e-5, rtol=1e-5), (loss, ref)

    # H*W not a multiple of 128 -> minimal lane pad + analytic sum_p fixup.
    logits, mask = _make_inputs(keys[1], 2, 4, 13, 13)
    loss = dice_loss_multiclass(logits, mask)
    ref = _reference(logits, mask)
    assert jnp.allclose(loss, ref, atol=1e-5, rtol=1e-5), (loss, ref)

    # Multi-tile path with a ragged last tile and the 2-way pixel split,
    # exercised at a small size by shrinking the tile height.
    logits, mask = _make_inputs(keys[2], 1, 4, 56, 64)
    loss = dice_loss_multiclass(logits, mask, max_st=8)
    ref = _reference(logits, mask)
    assert jnp.allclose(loss, ref, atol=1e-5, rtol=1e-5), (loss, ref)

    jax.block_until_ready(loss)
    print("KERNEL_OK")
</pallas_src>

<mosaic_0001>
module attributes {stable_mosaic.version = 11 : i64} {
  func.func @_dice_partial_kernel(%arg0: i32, %arg1: i32, %arg2: i32, %arg3: memref<1x4x2x128xf32, #tpu.memory_space<vmem>>, %arg4: memref<1x4x2x128xf32, #tpu.memory_space<vmem>>, %arg5: memref<1x1x3x4x128xf32, #tpu.memory_space<vmem>>, %arg6: memref<3x4x128xf32, #tpu.memory_space<vmem>>) attributes {dimension_semantics = [#tpu.dimension_semantics<parallel>, #tpu.dimension_semantics<parallel>, #tpu.dimension_semantics<arbitrary>], iteration_bounds = array<i64: 2, 1, 1>, scalar_prefetch = 0 : i64, scratch_operands = 1 : i64, tpu.core_type = #tpu.core_type<tc>, window_params = [{transform_indices = @transform_0, window_bounds = array<i64: 1, 4, 2, 128>}, {transform_indices = @transform_1, window_bounds = array<i64: 1, 4, 2, 128>}, {transform_indices = @transform_2, window_bounds = array<i64: 1, 1, 3, 4, 128>}]} {
    %c0_i32 = arith.constant 0 : i32
    %0 = arith.cmpi eq, %arg2, %c0_i32 : i32
    %1 = arith.extui %0 : i1 to i32
    %c0_i32_0 = arith.constant 0 : i32
    %2 = arith.cmpi ne, %1, %c0_i32_0 : i32
    scf.if %2 {
      %cst_30 = arith.constant 0.000000e+00 : f32
      %42 = vector.broadcast %cst_30 : f32 to vector<3x4x128xf32>
      %c0_31 = arith.constant 0 : index
      %c0_32 = arith.constant 0 : index
      %c0_33 = arith.constant 0 : index
      %43 = vector.load %arg6[%c0_31, %c0_32, %c0_33] : memref<3x4x128xf32, #tpu.memory_space<vmem>>, vector<3x4x128xf32>
      tpu.vector_store %arg6[%c0_31, %c0_32, %c0_33], %42 {strides = array<i32>} : memref<3x4x128xf32, #tpu.memory_space<vmem>>, vector<3x4x128xf32>,
    } else {
    }
    %c0 = arith.constant 0 : index
    %c0_1 = arith.constant 0 : index
    %c0_2 = arith.constant 0 : index
    %c0_3 = arith.constant 0 : index
    %3 = vector.load %arg3[%c0, %c0_1, %c0_2, %c0_3] : memref<1x4x2x128xf32, #tpu.memory_space<vmem>>, vector<1x4x2x128xf32>
    %4 = vector.shape_cast %3 : vector<1x4x2x128xf32> to vector<4x2x128xf32>
    %c0_4 = arith.constant 0 : index
    %c0_5 = arith.constant 0 : index
    %c0_6 = arith.constant 0 : index
    %c0_7 = arith.constant 0 : index
    %5 = vector.load %arg4[%c0_4, %c0_5, %c0_6, %c0_7] : memref<1x4x2x128xf32, #tpu.memory_space<vmem>>, vector<1x4x2x128xf32>
    %6 = vector.shape_cast %5 : vector<1x4x2x128xf32> to vector<4x2x128xf32>
    %cst = arith.constant dense<0xFF800000> : vector<2x128xf32>
    %7 = vector.multi_reduction <maximumf>, %4, %cst [0] : vector<4x2x128xf32> to vector<2x128xf32>
    %8 = vector.shape_cast %7 : vector<2x128xf32> to vector<1x2x128xf32>
    %9 = vector.broadcast %8 : vector<1x2x128xf32> to vector<4x2x128xf32>
    %10 = arith.subf %4, %9 : vector<4x2x128xf32>
    %11 = math.exp %10 : vector<4x2x128xf32>
    %cst_8 = arith.constant dense<0.000000e+00> : vector<2x128xf32>
    %12 = vector.multi_reduction <add>, %11, %cst_8 [0] : vector<4x2x128xf32> to vector<2x128xf32>
    %13 = vector.shape_cast %12 : vector<2x128xf32> to vector<1x2x128xf32>
    %14 = tpu.reciprocal %13 : vector<1x2x128xf32> -> vector<1x2x128xf32>
    %15 = vector.broadcast %14 : vector<1x2x128xf32> to vector<4x2x128xf32>
    %16 = arith.mulf %11, %15 : vector<4x2x128xf32>
    %c0_9 = arith.constant 0 : index
    %c0_10 = arith.constant 0 : index
    %c0_11 = arith.constant 0 : index
    %17 = vector.load %arg6[%c0_9, %c0_10, %c0_11] : memref<3x4x128xf32, #tpu.memory_space<vmem>>, vector<1x4x128xf32>
    %18 = vector.shape_cast %17 : vector<1x4x128xf32> to vector<4x128xf32>
    %19 = arith.mulf %16, %6 : vector<4x2x128xf32>
    %cst_12 = arith.constant dense<0.000000e+00> : vector<4x128xf32>
    %20 = vector.multi_reduction <add>, %19, %cst_12 [1] : vector<4x2x128xf32> to vector<4x128xf32>
    %21 = arith.addf %18, %20 : vector<4x128xf32>
    %c0_13 = arith.constant 0 : index
    %c0_14 = arith.constant 0 : index
    %c0_15 = arith.constant 0 : index
    %22 = vector.load %arg6[%c0_13, %c0_14, %c0_15] : memref<3x4x128xf32, #tpu.memory_space<vmem>>, vector<1x4x128xf32>
    %23 = vector.shape_cast %22 : vector<1x4x128xf32> to vector<4x128xf32>
    %24 = vector.shape_cast %21 : vector<4x128xf32> to vector<1x4x128xf32>
    tpu.vector_store %arg6[%c0_13, %c0_14, %c0_15], %24 {strides = array<i32>} : memref<3x4x128xf32, #tpu.memory_space<vmem>>, vector<1x4x128xf32>,
    %c1 = arith.constant 1 : index
    %c0_16 = arith.constant 0 : index
    %c0_17 = arith.constant 0 : index
    %25 = vector.load %arg6[%c1, %c0_16, %c0_17] : memref<3x4x128xf32, #tpu.memory_space<vmem>>, vector<1x4x128xf32>
    %26 = vector.shape_cast %25 : vector<1x4x128xf32> to vector<4x128xf32>
    %cst_18 = arith.constant dense<0.000000e+00> : vector<4x128xf32>
    %27 = vector.multi_reduction <add>, %16, %cst_18 [1] : vector<4x2x128xf32> to vector<4x128xf32>
    %28 = arith.addf %26, %27 : vector<4x128xf32>
    %c1_19 = arith.constant 1 : index
    %c0_20 = arith.constant 0 : index
    %c0_21 = arith.constant 0 : index
    %29 = vector.load %arg6[%c1_19, %c0_20, %c0_21] : memref<3x4x128xf32, #tpu.memory_space<vmem>>, vector<1x4x128xf32>
    %30 = vector.shape_cast %29 : vector<1x4x128xf32> to vector<4x128xf32>
    %31 = vector.shape_cast %28 : vector<4x128xf32> to vector<1x4x128xf32>
    tpu.vector_store %arg6[%c1_19, %c0_20, %c0_21], %31 {strides = array<i32>} : memref<3x4x128xf32, #tpu.memory_space<vmem>>, vector<1x4x128xf32>,
    %c2 = arith.constant 2 : index
    %c0_22 = arith.constant 0 : index
    %c0_23 = arith.constant 0 : index
    %32 = vector.load %arg6[%c2, %c0_22, %c0_23] : memref<3x4x128xf32, #tpu.memory_space<vmem>>, vector<1x4x128xf32>
    %33 = vector.shape_cast %32 : vector<1x4x128xf32> to vector<4x128xf32>
    %cst_24 = arith.constant dense<0.000000e+00> : vector<4x128xf32>
    %34 = vector.multi_reduction <add>, %6, %cst_24 [1] : vector<4x2x128xf32> to vector<4x128xf32>
    %35 = arith.addf %33, %34 : vector<4x128xf32>
    %c2_25 = arith.constant 2 : index
    %c0_26 = arith.constant 0 : index
    %c0_27 = arith.constant 0 : index
    %36 = vector.load %arg6[%c2_25, %c0_26, %c0_27] : memref<3x4x128xf32, #tpu.memory_space<vmem>>, vector<1x4x128xf32>
    %37 = vector.shape_cast %36 : vector<1x4x128xf32> to vector<4x128xf32>
    %38 = vector.shape_cast %35 : vector<4x128xf32> to vector<1x4x128xf32>
    tpu.vector_store %arg6[%c2_25, %c0_26, %c0_27], %38 {strides = array<i32>} : memref<3x4x128xf32, #tpu.memory_space<vmem>>, vector<1x4x128xf32>,
    %c0_i32_28 = arith.constant 0 : i32
    %39 = arith.cmpi eq, %arg2, %c0_i32_28 : i32
    %40 = arith.extui %39 : i1 to i32
    %c0_i32_29 = arith.constant 0 : i32
    %41 = arith.cmpi ne, %40, %c0_i32_29 : i32
    scf.if %41 {
      %c0_30 = arith.constant 0 : index
      %c0_31 = arith.constant 0 : index
      %c0_32 = arith.constant 0 : index
      %42 = vector.load %arg6[%c0_30, %c0_31, %c0_32] : memref<3x4x128xf32, #tpu.memory_space<vmem>>, vector<3x4x128xf32>
      %c0_33 = arith.constant 0 : index
      %c0_34 = arith.constant 0 : index
      %c0_35 = arith.constant 0 : index
      %c0_36 = arith.constant 0 : index
      %c0_37 = arith.constant 0 : index
      %43 = vector.load %arg5[%c0_33, %c0_34, %c0_35, %c0_36, %c0_37] : memref<1x1x3x4x128xf32, #tpu.memory_space<vmem>>, vector<1x1x3x4x128xf32>
      %44 = vector.shape_cast %43 : vector<1x1x3x4x128xf32> to vector<3x4x128xf32>
      %45 = vector.shape_cast %42 : vector<3x4x128xf32> to vector<1x1x3x4x128xf32>
      tpu.vector_store %arg5[%c0_33, %c0_34, %c0_35, %c0_36, %c0_37], %45 {strides = array<i32>} : memref<1x1x3x4x128xf32, #tpu.memory_space<vmem>>, vector<1x1x3x4x128xf32>,
    } else {
    }
    return
  }
  func.func @transform_0(%arg0: i32, %arg1: i32, %arg2: i32) -> (i32, i32, i32, i32) {
    %c1_i32 = arith.constant 1 : i32
    %0 = arith.muli %arg1, %c1_i32 : i32
    %1 = arith.addi %0, %arg2 : i32
    %c0_i32 = arith.constant 0 : i32
    %c0_i32_0 = arith.constant 0 : i32
    %c0_i32_1 = arith.constant 0 : i32
    return %arg0, %c0_i32, %1, %c0_i32_0 : i32, i32, i32, i32
  }
  func.func @transform_1(%arg0: i32, %arg1: i32, %arg2: i32) -> (i32, i32, i32, i32) {
    %c1_i32 = arith.constant 1 : i32
    %0 = arith.muli %arg1, %c1_i32 : i32
    %1 = arith.addi %0, %arg2 : i32
    %c0_i32 = arith.constant 0 : i32
    %c0_i32_0 = arith.constant 0 : i32
    %c0_i32_1 = arith.constant 0 : i32
    return %arg0, %c0_i32, %1, %c0_i32_0 : i32, i32, i32, i32
  }
  func.func @transform_2(%arg0: i32, %arg1: i32, %arg2: i32) -> (i32, i32, i32, i32, i32) {
    %c0_i32 = arith.constant 0 : i32
    %c0_i32_0 = arith.constant 0 : i32
    %c0_i32_1 = arith.constant 0 : i32
    %c0_i32_2 = arith.constant 0 : i32
    return %arg0, %arg1, %c0_i32, %c0_i32_0, %c0_i32_1 : i32, i32, i32, i32, i32
  }
}

</mosaic_0001>

<llo_original>
// kernel: tpu_custom_call.1
$region0: #{tpu_custom_call.1}
  #allocation0 [shape = 'u32[]', space=smem, size = 0x4, offset = 0x4, fixed_abs, tag = 'smem constant byte address 0x4 - core index']
  #allocation1 [shape = 'u32[144,128]{1,0:T(1,128)}', space=vmem, size = 0x12000, scoped, tag = 'internal scratch']
  #allocation2 [shape = 'f32[3,4,128]{2,1,0:T(4,128)}', space=vmem, size = 0x1800, scoped, tag = 'scratch operand']
  %s0 = inlined_call_operand.hbm [shape: f32[2,4,2,128], index: 0, kind: input, shape index: {}]
  %s1 = inlined_call_operand.hbm [shape: f32[2,4,2,128], index: 1, kind: input, shape index: {}]
  %s2 = inlined_call_operand.hbm [shape: f32[2,1,3,4,128], index: 2, kind: output, shape index: {}]
  %s3 = sld [smem:[#allocation0]]
  $region57: #{tpu_custom_call.1} parent=0
    _
  %s5 = ssub.s32 1, %s3
  %s6 = scalar_select 0, %s5, %s3
  $region1: #{tpu_custom_call.1} parent=0
    #allocation3 [shape = 'u8[8192]{0}', space=vmem, size = 0x2000, scoped, tag = 'input window, operand 0']
    #allocation4 [shape = 's32[2]{0}', space=sflag, size = 0x8, scoped, tag = 'scoped memory for tpu_custom_call.1']
    #allocation5 [shape = 's32[2]{0}', space=sflag, size = 0x8, scoped, tag = 'scoped memory for tpu_custom_call.1']
    #allocation6 [shape = 'u8[8192]{0}', space=vmem, size = 0x2000, scoped, tag = 'input window, operand 1']
    #allocation7 [shape = 's32[2]{0}', space=sflag, size = 0x8, scoped, tag = 'scoped memory for tpu_custom_call.1']
    #allocation8 [shape = 'u8[12288]{0}', space=vmem, size = 0x3000, scoped, tag = 'output window, operand 0']
    %7 = vsyncpa [#allocation4], 0
    %s8 = scalar_lea.sflag [#allocation4], 1
    %9 = vsyncpa %s8, 0
    %10 = vsyncpa [#allocation7], 0
    %s11 = scalar_lea.sflag [#allocation7], 1
    %12 = vsyncpa %s11, 0
    %13 = vsyncpa [#allocation5], 0
    %s14 = scalar_lea.sflag [#allocation5], 1
    %15 = vsyncpa %s14, 0
    loop: start=0, step=1, limit=4
    $region2: #{tpu_custom_call.1} parent=1 // loop_pre_header
      _
    $region3: #{tpu_custom_call.1} parent=1 // loop_header
      %s17 = sphi 0, %s21
      %p18 = scmp.ge.s32.totalorder %s17, 4
      %s24 = sphi 0, %s43
      %s25 = sphi 0, %s39
      %s26 = sphi 0, %s35
      %s27 = sphi 0, %s24
      %s28 = sphi 0, %s25
      %s29 = sphi 0, %s26
      %s30 = sphi 0, %s27
      %s31 = sphi 0, %s28
      %s32 = sphi 0, %s29
      %s50 = sphi 0, %s52
      %s53 = sphi 0, %s50
      %s54 = sphi 0, %s53
      %s70 = sphi 0, %s54
      %s80 = sphi 0, %s82
      %s83 = sphi 0, %s80
      %s84 = sphi 0, %s83
      %s100 = sphi 0, %s84
      %s108 = sphi 0, %s110
      %s111 = sphi 0, %s108
      %s112 = sphi 0, %s111
      %s128 = sphi 0, %s112
    $region4: #{tpu_custom_call.1} parent=1 // loop_header_branch
      %20 = sbr.rel (%p18) target = $region8
    $region5: #{tpu_custom_call.1} parent=1 // loop_body
      %s22 = ssub.s32 %s17, 1
      %s23 = ssub.s32 %s17, 2
      %s33 = sadd.s32 1, %s26
      %p34 = scmp.ge.s32.totalorder %s33, 1
      %s35 = scalar_select %p34, 0, %s33
      %s36 = sadd.s32 1, %s25
      %s37 = scalar_select %p34, %s36, %s25
      %p38 = scmp.ge.s32.totalorder %s37, 1
      %s39 = scalar_select %p38, 0, %s37
      %s40 = sadd.s32 1, %s24
      %s41 = scalar_select %p38, %s40, %s24
      %p42 = scmp.ge.s32.totalorder %s41, 2
      %s43 = scalar_select %p42, 0, %s41
      %s44 = sadd.s32 %s25, %s26
      %s45 = sadd.s32 %s39, %s35
      %s46 = ssub.s32 %s24, %s43
      %s47 = ssub.s32 %s44, %s45
      %s48 = sor.u32 %s46, %s47
      %p49 = scmp.eq.s32.totalorder %s48, 0
      %s51 = sadd.s32 %s50, 1
      %s52 = scalar_select %p49, %s50, %s51
      %p55 = pneg %p49
      %p56 = scmp.eq.s32.totalorder %s17, 1
      %p57 = por %p55, %p56
      %p58 = scmp.ne.s32.totalorder %s50, %s53
      %p59 = scmp.eq.s32.totalorder %s17, 0
      %p60 = por %p58, %p59
      %p61 = scmp.ne.s32.totalorder %s50, %s53
      %p62 = scmp.eq.s32.totalorder %s22, 1
      %p63 = por %p61, %p62
      %p64 = scmp.ne.s32.totalorder %s53, %s54
      %p65 = scmp.eq.s32.totalorder %s22, 0
      %p66 = por %p64, %p65
      %p67 = scmp.ne.s32.totalorder %s53, %s54
      %p68 = scmp.eq.s32.totalorder %s23, 1
      %p69 = por %p67, %p68
      %p71 = scmp.ne.s32.totalorder %s54, %s70
      %p72 = scmp.eq.s32.totalorder %s23, 0
      %p73 = por %p71, %p72
      %s74 = sadd.s32 %s25, %s26
      %s75 = sadd.s32 %s39, %s35
      %s76 = ssub.s32 %s24, %s43
      %s77 = ssub.s32 %s74, %s75
      %s78 = sor.u32 %s76, %s77
      %p79 = scmp.eq.s32.totalorder %s78, 0
      %s81 = sadd.s32 %s80, 1
      %s82 = scalar_select %p79, %s80, %s81
      %p85 = pneg %p79
      %p86 = scmp.eq.s32.totalorder %s17, 1
      %p87 = por %p85, %p86
      %p88 = scmp.ne.s32.totalorder %s80, %s83
      %p89 = scmp.eq.s32.totalorder %s17, 0
      %p90 = por %p88, %p89
      %p91 = scmp.ne.s32.totalorder %s80, %s83
      %p92 = scmp.eq.s32.totalorder %s22, 1
      %p93 = por %p91, %p92
      %p94 = scmp.ne.s32.totalorder %s83, %s84
      %p95 = scmp.eq.s32.totalorder %s22, 0
      %p96 = por %p94, %p95
      %p97 = scmp.ne.s32.totalorder %s83, %s84
      %p98 = scmp.eq.s32.totalorder %s23, 1
      %p99 = por %p97, %p98
      %p101 = scmp.ne.s32.totalorder %s84, %s100
      %p102 = scmp.eq.s32.totalorder %s23, 0
      %p103 = por %p101, %p102
      %s104 = ssub.s32 %s24, %s43
      %s105 = ssub.s32 %s25, %s39
      %s106 = sor.u32 %s104, %s105
      %p107 = scmp.eq.s32.totalorder %s106, 0
      %s109 = sadd.s32 %s108, 1
      %s110 = scalar_select %p107, %s108, %s109
      %p113 = pneg %p107
      %p114 = scmp.eq.s32.totalorder %s17, 1
      %p115 = por %p113, %p114
      %p116 = scmp.ne.s32.totalorder %s108, %s111
      %p117 = scmp.eq.s32.totalorder %s17, 0
      %p118 = por %p116, %p117
      %p119 = scmp.ne.s32.totalorder %s108, %s111
      %p120 = scmp.eq.s32.totalorder %s22, 1
      %p121 = por %p119, %p120
      %p122 = scmp.ne.s32.totalorder %s111, %s112
      %p123 = scmp.eq.s32.totalorder %s22, 0
      %p124 = por %p122, %p123
      %p125 = scmp.ne.s32.totalorder %s111, %s112
      %p126 = scmp.eq.s32.totalorder %s23, 1
      %p127 = por %p125, %p126
      %p129 = scmp.ne.s32.totalorder %s112, %s128
      %p130 = scmp.eq.s32.totalorder %s23, 0
      %p131 = por %p129, %p130
      %p132 = scmp.le.s32.totalorder 1, %s17
      %p133 = scmp.lt.s32.totalorder %s17, 3
      %p134 = pnand %p132, %p133
      %p135 = pneg %p134
      // Predicated region
      $region9: #{tpu_custom_call.1} parent=5 // pred_check
        _
      $region10: #{tpu_custom_call.1} parent=5 // pred_check_branch
        %137 = sbr.rel (%p134) target = $region12
      $region11: #{tpu_custom_call.1} parent=5 // pred_region
        %s138 = ssub.s32 %s17, 1
      $region12: #{tpu_custom_call.1} parent=5 // pred_fallthru
        _
      %p139 = scmp.lt.s32.totalorder %s17, 2
      // Predicated region
      $region13: #{tpu_custom_call.1} parent=5 // pred_check
        %p140 = pneg %p139
      $region14: #{tpu_custom_call.1} parent=5 // pred_check_branch
        %142 = sbr.rel (%p140) target = $region16
      $region15: #{tpu_custom_call.1} parent=5 // pred_region
        // Predicated region
        $region17: #{tpu_custom_call.1} parent=15 // pred_check
          %p143 = pneg %p60
        $region18: #{tpu_custom_call.1} parent=15 // pred_check_branch
          %145 = sbr.rel (%p143) target = $region20
        $region19: #{tpu_custom_call.1} parent=15 // pred_region
          %s146 = sand.u32 %s50, 1
          %s147 = scalar_lea.sflag [#allocation4], %s146
          %s148 = sand.u32 %s50, 1
          %s149 = smul.addr %s148, 8
          %s150 = scalar_lea.vmem [#allocation3], %s149
          %s151 = sadd.s32 %s25, %s26
          %s153 = ssub.s32 128, 128
          %154 = vsyncadd %s147, %s153
          %s155 = smul.addr %s24, 4
          %s156 = sadd.s32 %s151, %s155
          %s157 = smul.addr %s156, 32
          %s158 = scalar_lea.hbm %s0, %s157
          %s159 = sshll.u32 %s150, 4
          %s160 = int_to_ptr.vmem [resolvable:$true] %s159
          %165 = dma.hbm_to_vmem [thread:$0]  %s158, 128, %s160, %s147, 32, 32, 2
        $region20: #{tpu_custom_call.1} parent=15 // pred_fallthru
          _
        // Predicated region
        $region21: #{tpu_custom_call.1} parent=15 // pred_check
          %p166 = pneg %p90
        $region22: #{tpu_custom_call.1} parent=15 // pred_check_branch
          %168 = sbr.rel (%p166) target = $region24
        $region23: #{tpu_custom_call.1} parent=15 // pred_region
          %s169 = sand.u32 %s80, 1
          %s170 = scalar_lea.sflag [#allocation7], %s169
          %s171 = sand.u32 %s80, 1
          %s172 = smul.addr %s171, 8
          %s173 = scalar_lea.vmem [#allocation6], %s172
          %s174 = sadd.s32 %s25, %s26
          %s176 = ssub.s32 128, 128
          %177 = vsyncadd %s170, %s176
          %s178 = smul.addr %s24, 4
          %s179 = sadd.s32 %s174, %s178
          %s180 = smul.addr %s179, 32
          %s181 = scalar_lea.hbm %s1, %s180
          %s182 = sshll.u32 %s173, 4
          %s183 = int_to_ptr.vmem [resolvable:$true] %s182
          %188 = dma.hbm_to_vmem [thread:$0]  %s181, 128, %s183, %s170, 32, 32, 2
        $region24: #{tpu_custom_call.1} parent=15 // pred_fallthru
          _
      $region16: #{tpu_custom_call.1} parent=5 // pred_fallthru
        _
      %p189 = scmp.le.s32.totalorder 1, %s17
      %p190 = scmp.lt.s32.totalorder %s17, 3
      %p191 = pnand %p189, %p190
      %p192 = pneg %p191
      // Predicated region
      $region25: #{tpu_custom_call.1} parent=5 // pred_check
        _
      $region26: #{tpu_custom_call.1} parent=5 // pred_check_branch
        %194 = sbr.rel (%p191) target = $region28
      $region27: #{tpu_custom_call.1} parent=5 // pred_region
        %s195 = ssub.s32 %s17, 1
        %s196 = sand.u32 %s53, 1
        %s197 = scalar_lea.sflag [#allocation4], %s196
        %s198 = sand.u32 %s53, 1
        %s199 = smul.addr %s198, 8
        %s200 = scalar_lea.vmem [#allocation3], %s199
        // Predicated region
        $region29: #{tpu_custom_call.1} parent=27 // pred_check
          %p201 = pneg %p66
        $region30: #{tpu_custom_call.1} parent=27 // pred_check_branch
          %203 = sbr.rel (%p201) target = $region32
        $region31: #{tpu_custom_call.1} parent=27 // pred_region
          %204 = dma.done %s197, 128
        $region32: #{tpu_custom_call.1} parent=27 // pred_fallthru
          _
        %s205 = sand.u32 %s83, 1
        %s206 = scalar_lea.sflag [#allocation7], %s205
        %s207 = sand.u32 %s83, 1
        %s208 = smul.addr %s207, 8
        %s209 = scalar_lea.vmem [#allocation6], %s208
        // Predicated region
        $region33: #{tpu_custom_call.1} parent=27 // pred_check
          %p210 = pneg %p96
        $region34: #{tpu_custom_call.1} parent=27 // pred_check_branch
          %212 = sbr.rel (%p210) target = $region36
        $region35: #{tpu_custom_call.1} parent=27 // pred_region
          %213 = dma.done %s206, 128
        $region36: #{tpu_custom_call.1} parent=27 // pred_fallthru
          _
        %s214 = sand.u32 %s53, 1
        %s215 = scalar_lea.sflag [#allocation4], %s214
        %s216 = sand.u32 %s53, 1
        %s217 = smul.addr %s216, 8
        %s218 = scalar_lea.vmem [#allocation3], %s217
        %p219 = pneg %p66
        %p220 = pneg %p63
        %s221 = sand.u32 %s83, 1
        %s222 = scalar_lea.sflag [#allocation7], %s221
        %s223 = sand.u32 %s83, 1
        %s224 = smul.addr %s223, 8
        %s225 = scalar_lea.vmem [#allocation6], %s224
        %p226 = pneg %p96
        %p227 = pneg %p93
        %p228 = pneg %p124
        %p229 = pneg %p121
        %s230 = sand.u32 %s111, 1
        %s231 = scalar_lea.sflag [#allocation5], %s230
        %s232 = sand.u32 %s111, 1
        %s233 = smul.addr %s232, 12
        %s234 = scalar_lea.vmem [#allocation8], %s233
        %s235 = sadd.s32 %s28, %s29
        %s236 = sadd.s32 %s28, %s29
        %p237 = scmp.eq.s32.totalorder %s29, 0
        // Predicated region
        $region37: #{tpu_custom_call.1} parent=27 // pred_check
          %p238 = pneg %p237
        $region38: #{tpu_custom_call.1} parent=27 // pred_check_branch
          %240 = sbr.rel (%p238) target = $region40
        $region39: #{tpu_custom_call.1} parent=27 // pred_region
          %241 = vst [vmem:[#allocation2] sm:$0xf] 0.0
          %242 = vst [vmem:[#allocation2 + $0x4] sm:$0xf] 0.0
          %243 = vst [vmem:[#allocation2 + $0x8] sm:$0xf] 0.0
        $region40: #{tpu_custom_call.1} parent=27 // pred_fallthru
          _
        %v244 = vld [vmem:[%s200] sm:$0x3]
        %v245 = vld [vmem:[%s200 + $0x2] sm:$0x3]
        %v246 = vld [vmem:[%s200 + $0x4] sm:$0x3]
        %v247 = vld [vmem:[%s200 + $0x6] sm:$0x3]
        %v248 = vld [vmem:[%s209] sm:$0x3]
        %v249 = vld [vmem:[%s209 + $0x2] sm:$0x3]
        %v250 = vld [vmem:[%s209 + $0x4] sm:$0x3]
        %v251 = vld [vmem:[%s209 + $0x6] sm:$0x3]
        %vm252 = vcmask 1041408
        %v253 = vsel %vm252, %v244, -inf
        %v254 = vsel %vm252, %v245, -inf
        %v255 = vsel %vm252, %v246, -inf
        %v256 = vsel %vm252, %v247, -inf
        %v257 = vmax.f32 %v253, %v254
        %v258 = vmax.f32 %v255, %v256
        %v259 = vmax.f32 %v257, %v258
        %v260 = vsub.f32 %v244, %v259
        %v261 = vsub.f32 %v245, %v259
        %v262 = vsub.f32 %v246, %v259
        %v263 = vsub.f32 %v247, %v259
        %v264 = vmul.f32 %v260, 1.442695
        %v265 = vpow.pop %v264
        %v266 = vmul.f32 %v261, 1.442695
        %v267 = vpow.pop %v266
        %v268 = vmul.f32 %v262, 1.442695
        %v269 = vpow.pop %v268
        %v270 = vmul.f32 %v263, 1.442695
        %v271 = vpow.pop %v270
        %v272 = vsel %vm252, %v265, 0.0
        %v273 = vsel %vm252, %v267, 0.0
        %v274 = vadd.f32 %v272, %v273
        %v275 = vsel %vm252, %v269, 0.0
        %v276 = vadd.f32 %v274, %v275
        %v277 = vsel %vm252, %v271, 0.0
        %v278 = vadd.f32 %v276, %v277
        %v279 = vrcp.pop %v278
        %v280 = vmul.f32 %v265, %v279
        %v281 = vmul.f32 %v267, %v279
        %v282 = vmul.f32 %v269, %v279
        %v283 = vmul.f32 %v271, %v279
        %v284 = vld [vmem:[#allocation2] sm:$0xf]
        %v285 = vmul.f32 %v280, %v248
        %v286 = vmul.f32 %v281, %v249
        %v287 = vmul.f32 %v282, %v250
        %v288 = vmul.f32 %v283, %v251
        %v289 = vsel %vm252, %v285, 0.0
        %v290 = vrot.slane %v289, 4
        %v291 = vadd.f32 %v289, %v290
        %v292 = vrot.slane %v291, 2
        %v293 = vadd.f32 %v291, %v292
        %v294 = vrot.slane %v293, 1
        %v295 = vadd.f32 %v293, %v294
        %v296 = vsel %vm252, %v286, 0.0
        %v297 = vrot.slane %v296, 4
        %v298 = vadd.f32 %v296, %v297
        %v299 = vrot.slane %v298, 2
        %v300 = vadd.f32 %v298, %v299
        %v301 = vrot.slane %v300, 1
        %v302 = vadd.f32 %v300, %v301
        %v303 = vsel %vm252, %v287, 0.0
        %v304 = vrot.slane %v303, 4
        %v305 = vadd.f32 %v303, %v304
        %v306 = vrot.slane %v305, 2
        %v307 = vadd.f32 %v305, %v306
        %v308 = vrot.slane %v307, 1
        %v309 = vadd.f32 %v307, %v308
        %v310 = vsel %vm252, %v288, 0.0
        %v311 = vrot.slane %v310, 4
        %v312 = vadd.f32 %v310, %v311
        %v313 = vrot.slane %v312, 2
        %v314 = vadd.f32 %v312, %v313
        %v315 = vrot.slane %v314, 1
        %v316 = vadd.f32 %v314, %v315
        %vm321 = vcmask 1041409
        %v322 = vsel %vm321, %v302, %v295
        %vm323 = vcmask 1042434
        %v324 = vsel %vm323, %v309, %v322
        %vm325 = vcmask 1043459
        %v326 = vsel %vm325, %v316, %v324
        %v328 = vadd.f32 %v284, %v326
        %329 = vst [vmem:[#allocation2] sm:$0xf] %v328
        %s330 = scalar_lea.vmem [#allocation2], 4
        %v331 = vld [vmem:[%s330] sm:$0xf]
        %v332 = vsel %vm252, %v280, 0.0
        %v333 = vrot.slane %v332, 4
        %v334 = vadd.f32 %v332, %v333
        %v335 = vrot.slane %v334, 2
        %v336 = vadd.f32 %v334, %v335
        %v337 = vrot.slane %v336, 1
        %v338 = vadd.f32 %v336, %v337
        %v339 = vsel %vm252, %v281, 0.0
        %v340 = vrot.slane %v339, 4
        %v341 = vadd.f32 %v339, %v340
        %v342 = vrot.slane %v341, 2
        %v343 = vadd.f32 %v341, %v342
        %v344 = vrot.slane %v343, 1
        %v345 = vadd.f32 %v343, %v344
        %v346 = vsel %vm252, %v282, 0.0
        %v347 = vrot.slane %v346, 4
        %v348 = vadd.f32 %v346, %v347
        %v349 = vrot.slane %v348, 2
        %v350 = vadd.f32 %v348, %v349
        %v351 = vrot.slane %v350, 1
        %v352 = vadd.f32 %v350, %v351
        %v353 = vsel %vm252, %v283, 0.0
        %v354 = vrot.slane %v353, 4
        %v355 = vadd.f32 %v353, %v354
        %v356 = vrot.slane %v355, 2
        %v357 = vadd.f32 %v355, %v356
        %v358 = vrot.slane %v357, 1
        %v359 = vadd.f32 %v357, %v358
        %v364 = vsel %vm321, %v345, %v338
        %v365 = vsel %vm323, %v352, %v364
        %v366 = vsel %vm325, %v359, %v365
        %v368 = vadd.f32 %v331, %v366
        %369 = vst [vmem:[%s330] sm:$0xf] %v368
        %s370 = scalar_lea.vmem [#allocation2], 8
        %v371 = vld [vmem:[%s370] sm:$0xf]
        %v372 = vsel %vm252, %v248, 0.0
        %v373 = vrot.slane %v372, 4
        %v374 = vadd.f32 %v372, %v373
        %v375 = vrot.slane %v374, 2
        %v376 = vadd.f32 %v374, %v375
        %v377 = vrot.slane %v376, 1
        %v378 = vadd.f32 %v376, %v377
        %v379 = vsel %vm252, %v249, 0.0
        %v380 = vrot.slane %v379, 4
        %v381 = vadd.f32 %v379, %v380
        %v382 = vrot.slane %v381, 2
        %v383 = vadd.f32 %v381, %v382
        %v384 = vrot.slane %v383, 1
        %v385 = vadd.f32 %v383, %v384
        %v386 = vsel %vm252, %v250, 0.0
        %v387 = vrot.slane %v386, 4
        %v388 = vadd.f32 %v386, %v387
        %v389 = vrot.slane %v388, 2
        %v390 = vadd.f32 %v388, %v389
        %v391 = vrot.slane %v390, 1
        %v392 = vadd.f32 %v390, %v391
        %v393 = vsel %vm252, %v251, 0.0
        %v394 = vrot.slane %v393, 4
        %v395 = vadd.f32 %v393, %v394
        %v396 = vrot.slane %v395, 2
        %v397 = vadd.f32 %v395, %v396
        %v398 = vrot.slane %v397, 1
        %v399 = vadd.f32 %v397, %v398
        %v404 = vsel %vm321, %v385, %v378
        %v405 = vsel %vm323, %v392, %v404
        %v406 = vsel %vm325, %v399, %v405
        %v408 = vadd.f32 %v371, %v406
        %409 = vst [vmem:[%s370] sm:$0xf] %v408
        // Predicated region
        $region41: #{tpu_custom_call.1} parent=27 // pred_check
          %p410 = pneg %p237
        $region42: #{tpu_custom_call.1} parent=27 // pred_check_branch
          %412 = sbr.rel (%p410) target = $region44
        $region43: #{tpu_custom_call.1} parent=27 // pred_region
          %v413 = vld [vmem:[#allocation2] sm:$0xf]
          %v414 = vld [vmem:[#allocation2 + $0x4] sm:$0xf]
          %v415 = vld [vmem:[#allocation2 + $0x8] sm:$0xf]
          %416 = vst [vmem:[%s234] sm:$0xf] %v413
          %417 = vst [vmem:[%s234 + $0x4] sm:$0xf] %v414
          %418 = vst [vmem:[%s234 + $0x8] sm:$0xf] %v415
        $region44: #{tpu_custom_call.1} parent=27 // pred_fallthru
          _
        %s419 = sand.u32 %s111, 1
        %s420 = scalar_lea.sflag [#allocation5], %s419
        %s421 = sand.u32 %s111, 1
        %s422 = smul.addr %s421, 12
        %s423 = scalar_lea.vmem [#allocation8], %s422
        // Predicated region
        $region45: #{tpu_custom_call.1} parent=27 // pred_check
          %p424 = pneg %p121
        $region46: #{tpu_custom_call.1} parent=27 // pred_check_branch
          %426 = sbr.rel (%p424) target = $region48
        $region47: #{tpu_custom_call.1} parent=27 // pred_region
          %s428 = ssub.s32 192, 192
          %429 = vsyncadd %s420, %s428
          %s430 = smul.addr %s28, 3
          %s431 = smul.addr %s27, 3
          %s432 = sadd.s32 %s430, %s431
          %s433 = smul.addr %s432, 64
          %s434 = scalar_lea.hbm %s2, %s433
          %s435 = sshll.u32 %s423, 4
          %s436 = int_to_ptr.vmem [resolvable:$true] %s435
          %441 = dma.vmem_to_hbm [thread:$0]  %s436, 192, %s434, %s420, 64, 64, 4
        $region48: #{tpu_custom_call.1} parent=27 // pred_fallthru
          _
      $region28: #{tpu_custom_call.1} parent=5 // pred_fallthru
        _
      %p442 = scmp.le.s32.totalorder 2, %s17
      // Predicated region
      $region49: #{tpu_custom_call.1} parent=5 // pred_check
        %p443 = pneg %p442
      $region50: #{tpu_custom_call.1} parent=5 // pred_check_branch
        %445 = sbr.rel (%p443) target = $region52
      $region51: #{tpu_custom_call.1} parent=5 // pred_region
        %s446 = ssub.s32 %s17, 2
        // Predicated region
        $region53: #{tpu_custom_call.1} parent=51 // pred_check
          %p447 = pneg %p127
        $region54: #{tpu_custom_call.1} parent=51 // pred_check_branch
          %449 = sbr.rel (%p447) target = $region56
        $region55: #{tpu_custom_call.1} parent=51 // pred_region
          %s450 = sand.u32 %s112, 1
          %s451 = scalar_lea.sflag [#allocation5], %s450
          %s452 = sand.u32 %s112, 1
          %s453 = smul.addr %s452, 12
          %s454 = scalar_lea.vmem [#allocation8], %s453
          %455 = dma.done %s451, 192
        $region56: #{tpu_custom_call.1} parent=51 // pred_fallthru
          _
      $region52: #{tpu_custom_call.1} parent=5 // pred_fallthru
        _
    $region6: #{tpu_custom_call.1} parent=1 // loop_footer
      %s21 = sadd.s32 1, %s17
    $region7: #{tpu_custom_call.1} parent=1 // loop_footer_branch
      %16 = sbr.rel target = $region3
    $region8: #{tpu_custom_call.1} parent=1 // loop_exit
      _
    %456 = vsyncpa [#allocation4], 1
    %s457 = scalar_lea.sflag [#allocation4], 1
    %458 = vsyncpa %s457, 1
    %459 = vsyncpa [#allocation7], 1
    %s460 = scalar_lea.sflag [#allocation7], 1
    %461 = vsyncpa %s460, 1
    %462 = vsyncpa [#allocation5], 1
    %s463 = scalar_lea.sflag [#allocation5], 1
    %464 = vsyncpa %s463, 1

</llo_original>
